<compile_context>
chip_gen: v5e
topology: v5e:2x2
jax: 0.10.0
libtpu: 0.0.40
codegen_flags: <defaults>
</compile_context>

<pallas_src>
import math

import jax
import jax.numpy as jnp
from jax.experimental import pallas as pl
from jax.experimental.pallas import tpu as pltpu


def _residual_kernel(x_ref, w_ref, b_ref, o_ref):
    """o_tile = gelu(x_tile @ W_cols + b_cols) + x_cols   (fn(x) + x, fused)."""
    tn = o_ref.shape[-1]
    j = pl.program_id(1)

    x = x_ref[...]                                            # (tm, D), native dtype
    # MXU matmul: native-dtype operands, f32 accumulation.
    y = jnp.dot(x, w_ref[...], preferred_element_type=jnp.float32)   # (tm, tn)
    y = y + b_ref[...].astype(jnp.float32)                    # bias broadcast (1, tn)
    fn_x = jax.nn.gelu(y, approximate=True)                   # tanh GELU -> EUP slot

    # Residual columns for this N tile (col0 == 0 when tn == D).
    col0 = pl.multiple_of(j * tn, 128) if tn % 128 == 0 else j * tn
    x_cols = x_ref[:, pl.ds(col0, tn)]
    o_ref[...] = (fn_x + x_cols.astype(jnp.float32)).astype(o_ref.dtype)


def _vmem_budget_bytes():
    """~85% of this generation's VMEM (headroom for Mosaic internal scratch)."""
    try:
        cap = int(pltpu.get_tpu_info().vmem_capacity_bytes)
    except Exception:
        cap = 64 * 1024 * 1024      # conservative fallback (v7x per-TC)
    return int(cap * 0.85)


def _round_down(v, m):
    return max(m, (v // m) * m)


def _choose_tiles(M, D, x_itemsize, w_itemsize, budget):
    # Sublane-pack granularity for the row axis: 8 f32 / 16 bf16 / 32 int8-fp8.
    row_mult = max(8, 32 // x_itemsize)

    # N tiling only if a resident (single-buffered) DxD weight would eat more
    # than half the budget; tn must divide D and stay lane-aligned (x128).
    tn = D
    if D * D * w_itemsize > budget // 2:
        for cand in (512, 256, 128):
            if D % cand == 0:
                tn = cand
                break
    w_bytes = D * D * w_itemsize if tn == D else 2 * D * tn * w_itemsize

    def fits(tm):
        x_b = 2 * tm * D * x_itemsize          # x tile, double-buffered
        o_b = 2 * tm * tn * x_itemsize         # out tile, double-buffered
        f32 = 2 * tm * tn * 4                  # f32 intermediates headroom
        return w_bytes + x_b + o_b + f32 <= budget

    tm_cap = 1024 if D <= 512 else 512         # bigger tiles when mem-bound (small D)
    tm = min(tm_cap, M)
    if tm < M:
        tm = _round_down(tm, row_mult)
    while tm > row_mult and not fits(tm):
        tm = _round_down(tm - row_mult, row_mult)
    # Keep >= 2 M-steps so both v7x TensorCores get work on the parallel axis.
    if M >= 2 * row_mult and pl.cdiv(M, tm) < 2:
        tm = _round_down(pl.cdiv(M, 2), row_mult)
    return tm, tn


def _maybe_single_buffered(shape, index_map):
    """Single-buffer a block whose index never changes (halves its VMEM cost)."""
    try:
        return pl.BlockSpec(shape, index_map, pipeline_mode=pl.Buffered(1))
    except Exception:                           # older JAX without pipeline_mode
        return pl.BlockSpec(shape, index_map)


def residual_forward(x, w, b, *, tm=None, tn=None):
    """x: [..., D]; w: [D, D]; b: [D].  Returns fn(x) + x, fn = GELU ∘ Linear."""
    orig_shape = x.shape
    D = orig_shape[-1]
    M = int(math.prod(orig_shape[:-1]))
    x2d = x.reshape(M, D)
    b2d = b.reshape(1, D)

    budget = _vmem_budget_bytes()
    auto_tm, auto_tn = _choose_tiles(M, D,
                                     jnp.dtype(x.dtype).itemsize,
                                     jnp.dtype(w.dtype).itemsize,
                                     budget)
    tm = auto_tm if tm is None else min(tm, M)
    tn = auto_tn if tn is None else tn

    m_steps = pl.cdiv(M, tm)
    n_steps = pl.cdiv(D, tn)
    resident_w = (tn == D)

    if resident_w:
        w_spec = _maybe_single_buffered((D, D), lambda i, j: (0, 0))
        b_spec = _maybe_single_buffered((1, D), lambda i, j: (0, 0))
    else:
        w_spec = pl.BlockSpec((D, tn), lambda i, j: (0, j))   # streamed columns
        b_spec = pl.BlockSpec((1, tn), lambda i, j: (0, j))

    w_reads = 1 if resident_w else m_steps
    cost = pl.CostEstimate(
        flops=2 * M * D * D + 4 * M * D,
        transcendentals=M * D,
        bytes_accessed=2 * x2d.nbytes + w_reads * w.nbytes + b2d.nbytes,
    )

    out2d = pl.pallas_call(
        _residual_kernel,
        out_shape=jax.ShapeDtypeStruct((M, D), x.dtype),
        grid_spec=pltpu.PrefetchScalarGridSpec(
            num_scalar_prefetch=0,
            grid=(m_steps, n_steps),
            in_specs=[
                pl.BlockSpec((tm, D), lambda i, j: (i, 0)),   # x tile, full width
                w_spec,
                b_spec,
            ],
            out_specs=pl.BlockSpec((tm, tn), lambda i, j: (i, j)),
        ),
        compiler_params=pltpu.CompilerParams(
            dimension_semantics=("parallel", "parallel"),     # megacore on v7x
            vmem_limit_bytes=budget,
        ),
        cost_estimate=cost,
    )(x2d, w, b2d)

    return out2d.reshape(orig_shape)


if __name__ == "__main__":
    key = jax.random.PRNGKey(0)
    kx, kw, kb = jax.random.split(key, 3)

    # Small demo shapes; hidden is a multiple of 128 so stores are lane-dense.
    B, S, D = 2, 8, 128
    x = jax.random.normal(kx, (B, S, D), dtype=jnp.float32)
    w = jax.random.normal(kw, (D, D), dtype=jnp.float32) * (1.0 / jnp.sqrt(D))
    b = jax.random.normal(kb, (D,), dtype=jnp.float32) * 0.01

    # ---- f32 test path (tight tolerance); tm=8 forces >=2 pipelined M steps.
    out = residual_forward(x, w, b, tm=8)
    jax.block_until_ready(out)
    ref = jax.nn.gelu(jnp.einsum("bsd,de->bse", x, w) + b, approximate=True) + x
    assert out.shape == x.shape
    assert jnp.allclose(out, ref, atol=1e-4, rtol=1e-4), "f32 mismatch vs reference"

    # ---- bf16 production path: MXU-native operands, f32 accumulation.
    xb, wb, bb = (t.astype(jnp.bfloat16) for t in (x, w, b))
    out_bf16 = residual_forward(xb, wb, bb)
    jax.block_until_ready(out_bf16)
    ref_bf16 = (jax.nn.gelu(
        jnp.einsum("bsd,de->bse", xb.astype(jnp.float32), wb.astype(jnp.float32))
        + bb.astype(jnp.float32), approximate=True) + xb.astype(jnp.float32))
    assert jnp.allclose(out_bf16.astype(jnp.float32), ref_bf16, atol=6e-2, rtol=6e-2), \
        "bf16 mismatch vs reference"

    print("KERNEL_OK")
</pallas_src>

<mosaic_0001>
module attributes {stable_mosaic.version = 11 : i64} {
  func.func @_residual_kernel(%arg0: i32, %arg1: i32, %arg2: memref<8x128xf32, #tpu.memory_space<vmem>>, %arg3: memref<128x128xf32, #tpu.memory_space<vmem>>, %arg4: memref<1x128xf32, #tpu.memory_space<vmem>>, %arg5: memref<8x128xf32, #tpu.memory_space<vmem>>) attributes {dimension_semantics = [#tpu.dimension_semantics<parallel>, #tpu.dimension_semantics<parallel>], iteration_bounds = array<i64: 2, 1>, scalar_prefetch = 0 : i64, scratch_operands = 0 : i64, tpu.core_type = #tpu.core_type<tc>, window_params = [{transform_indices = @transform_0, window_bounds = array<i64: 8, 128>}, {pipeline_mode = #tpu.pipeline_mode<synchronous>, transform_indices = @transform_1, window_bounds = array<i64: 128, 128>}, {pipeline_mode = #tpu.pipeline_mode<synchronous>, transform_indices = @transform_2, window_bounds = array<i64: 1, 128>}, {transform_indices = @transform_3, window_bounds = array<i64: 8, 128>}]} {
    %c0 = arith.constant 0 : index
    %c0_0 = arith.constant 0 : index
    %0 = vector.load %arg2[%c0, %c0_0] : memref<8x128xf32, #tpu.memory_space<vmem>>, vector<8x128xf32>
    %c0_1 = arith.constant 0 : index
    %c0_2 = arith.constant 0 : index
    %1 = vector.load %arg3[%c0_1, %c0_2] : memref<128x128xf32, #tpu.memory_space<vmem>>, vector<128x128xf32>
    %cst = arith.constant dense<0.000000e+00> : vector<8x128xf32>
    %2 = tpu.matmul %0, %1, %cst {dimension_numbers = #tpu.dot_dimension_numbers<[1], [0], [0], [1], [0, 0, 1, 1], [], []>} : vector<8x128xf32>, vector<128x128xf32>, vector<8x128xf32> -> vector<8x128xf32>
    %c0_3 = arith.constant 0 : index
    %c0_4 = arith.constant 0 : index
    %3 = vector.load %arg4[%c0_3, %c0_4] : memref<1x128xf32, #tpu.memory_space<vmem>>, vector<1x128xf32>
    %4 = vector.broadcast %3 : vector<1x128xf32> to vector<8x128xf32>
    %5 = arith.addf %2, %4 : vector<8x128xf32>
    %6 = arith.mulf %5, %5 : vector<8x128xf32>
    %7 = arith.mulf %5, %6 : vector<8x128xf32>
    %cst_5 = arith.constant 4.471500e-02 : f32
    %8 = vector.broadcast %cst_5 : f32 to vector<8x128xf32>
    %9 = arith.mulf %8, %7 : vector<8x128xf32>
    %10 = arith.addf %5, %9 : vector<8x128xf32>
    %cst_6 = arith.constant 0.797884583 : f32
    %11 = vector.broadcast %cst_6 : f32 to vector<8x128xf32>
    %12 = arith.mulf %11, %10 : vector<8x128xf32>
    %13 = math.tanh %12 : vector<8x128xf32>
    %cst_7 = arith.constant 1.000000e+00 : f32
    %14 = vector.broadcast %cst_7 : f32 to vector<8x128xf32>
    %15 = arith.addf %14, %13 : vector<8x128xf32>
    %cst_8 = arith.constant 5.000000e-01 : f32
    %16 = vector.broadcast %cst_8 : f32 to vector<8x128xf32>
    %17 = arith.mulf %16, %15 : vector<8x128xf32>
    %18 = arith.mulf %5, %17 : vector<8x128xf32>
    %c128_i32 = arith.constant 128 : i32
    %19 = arith.muli %arg1, %c128_i32 : i32
    %20 = tpu.assume_multiple %19, 128 : i32
    %c0_9 = arith.constant 0 : index
    %21 = arith.index_cast %20 : i32 to index
    %22 = vector.load %arg2[%c0_9, %21] : memref<8x128xf32, #tpu.memory_space<vmem>>, vector<8x128xf32>
    %23 = arith.addf %18, %22 : vector<8x128xf32>
    %c0_10 = arith.constant 0 : index
    %c0_11 = arith.constant 0 : index
    %24 = vector.load %arg5[%c0_10, %c0_11] : memref<8x128xf32, #tpu.memory_space<vmem>>, vector<8x128xf32>
    tpu.vector_store %arg5[%c0_10, %c0_11], %23 {strides = array<i32>} : memref<8x128xf32, #tpu.memory_space<vmem>>, vector<8x128xf32>,
    return
  }
  func.func @transform_0(%arg0: i32, %arg1: i32) -> (i32, i32) {
    %c0_i32 = arith.constant 0 : i32
    %c0_i32_0 = arith.constant 0 : i32
    return %arg0, %c0_i32 : i32, i32
  }
  func.func @transform_1(%arg0: i32, %arg1: i32) -> (i32, i32) {
    %c0_i32 = arith.constant 0 : i32
    %c0_i32_0 = arith.constant 0 : i32
    %c0_i32_1 = arith.constant 0 : i32
    return %c0_i32, %c0_i32_0 : i32, i32
  }
  func.func @transform_2(%arg0: i32, %arg1: i32) -> (i32, i32) {
    %c0_i32 = arith.constant 0 : i32
    %c0_i32_0 = arith.constant 0 : i32
    %c0_i32_1 = arith.constant 0 : i32
    return %c0_i32, %c0_i32_0 : i32, i32
  }
  func.func @transform_3(%arg0: i32, %arg1: i32) -> (i32, i32) {
    %c0_i32 = arith.constant 0 : i32
    return %arg0, %arg1 : i32, i32
  }
}

</mosaic_0001>

<llo_original>
// kernel: tpu_custom_call.1
$region0: #{tpu_custom_call.1}
  #allocation0 [shape = 'u32[]', space=smem, size = 0x4, offset = 0x4, fixed_abs, tag = 'smem constant byte address 0x4 - core index']
  #allocation1 [shape = 'u32[72,128]{1,0:T(1,128)}', space=vmem, size = 0x9000, scoped, tag = 'internal scratch']
  %s0 = inlined_call_operand.hbm [shape: f32[16,128], index: 0, kind: input, shape index: {}]
  %s1 = inlined_call_operand.hbm [shape: f32[128,128], index: 1, kind: input, shape index: {}]
  %s2 = inlined_call_operand.vmem [shape: f32[1,128], index: 2, kind: input, shape index: {}]
  %s3 = inlined_call_operand.hbm [shape: f32[16,128], index: 3, kind: output, shape index: {}]
  %s4 = sld [smem:[#allocation0]]
  $region53: #{tpu_custom_call.1} parent=0
    _
  %s6 = ssub.s32 1, %s4
  %s7 = scalar_select 0, %s6, %s4
  $region1: #{tpu_custom_call.1} parent=0
    #allocation2 [shape = 'u8[8192]{0}', space=vmem, size = 0x2000, scoped, tag = 'input window, operand 0']
    #allocation3 [shape = 's32[2]{0}', space=sflag, size = 0x8, scoped, tag = 'scoped memory for tpu_custom_call.1']
    #allocation4 [shape = 's32[2]{0}', space=sflag, size = 0x8, scoped, tag = 'scoped memory for tpu_custom_call.1']
    #allocation5 [shape = 'u8[65536]{0}', space=vmem, size = 0x10000, scoped, tag = 'input window, operand 1, single buffered']
    #allocation6 [shape = 's32[1]{0}', space=sflag, size = 0x4, scoped, tag = 'scoped memory for tpu_custom_call.1']
    #allocation7 [shape = 'u8[8192]{0}', space=vmem, size = 0x2000, scoped, tag = 'output window, operand 0']
    %8 = vsyncpa [#allocation3], 0
    %s9 = scalar_lea.sflag [#allocation3], 1
    %10 = vsyncpa %s9, 0
    %11 = vsyncpa [#allocation6], 0
    %12 = vsyncpa [#allocation4], 0
    %s13 = scalar_lea.sflag [#allocation4], 1
    %14 = vsyncpa %s13, 0
    loop: start=0, step=1, limit=4
    $region2: #{tpu_custom_call.1} parent=1 // loop_pre_header
      _
    $region3: #{tpu_custom_call.1} parent=1 // loop_header
      %s16 = sphi 0, %s20
      %p17 = scmp.ge.s32.totalorder %s16, 4
      %s23 = sphi 0, %s35
      %s24 = sphi 0, %s31
      %s25 = sphi 0, %s23
      %s26 = sphi 0, %s24
      %s27 = sphi 0, %s25
      %s28 = sphi 0, %s26
      %s38 = sphi 0, %s40
      %s41 = sphi 0, %s38
      %s42 = sphi 0, %s41
      %s58 = sphi 0, %s42
      %s62 = sphi 0, %s62
      %s64 = sphi 0, %s62
      %s65 = sphi 0, %s64
      %s79 = sphi 0, %s65
      %s83 = sphi 0, %s83
      %s85 = sphi 0, %s83
      %s86 = sphi 0, %s85
      %s100 = sphi 0, %s86
      %s108 = sphi 0, %s110
      %s111 = sphi 0, %s108
      %s112 = sphi 0, %s111
      %s128 = sphi 0, %s112
    $region4: #{tpu_custom_call.1} parent=1 // loop_header_branch
      %19 = sbr.rel (%p17) target = $region8
    $region5: #{tpu_custom_call.1} parent=1 // loop_body
      %s21 = ssub.s32 %s16, 1
      %s22 = ssub.s32 %s16, 2
      %s29 = sadd.s32 1, %s24
      %p30 = scmp.ge.s32.totalorder %s29, 1
      %s31 = scalar_select %p30, 0, %s29
      %s32 = sadd.s32 1, %s23
      %s33 = scalar_select %p30, %s32, %s23
      %p34 = scmp.ge.s32.totalorder %s33, 2
      %s35 = scalar_select %p34, 0, %s33
      %s36 = ssub.s32 %s23, %s35
      %p37 = scmp.eq.s32.totalorder %s36, 0
      %s39 = sadd.s32 %s38, 1
      %s40 = scalar_select %p37, %s38, %s39
      %p43 = pneg %p37
      %p44 = scmp.eq.s32.totalorder %s16, 1
      %p45 = por %p43, %p44
      %p46 = scmp.ne.s32.totalorder %s38, %s41
      %p47 = scmp.eq.s32.totalorder %s16, 0
      %p48 = por %p46, %p47
      %p49 = scmp.ne.s32.totalorder %s38, %s41
      %p50 = scmp.eq.s32.totalorder %s21, 1
      %p51 = por %p49, %p50
      %p52 = scmp.ne.s32.totalorder %s41, %s42
      %p53 = scmp.eq.s32.totalorder %s21, 0
      %p54 = por %p52, %p53
      %p55 = scmp.ne.s32.totalorder %s41, %s42
      %p56 = scmp.eq.s32.totalorder %s22, 1
      %p57 = por %p55, %p56
      %p59 = scmp.ne.s32.totalorder %s42, %s58
      %p60 = scmp.eq.s32.totalorder %s22, 0
      %p61 = por %p59, %p60
      %s63 = sadd.s32 %s62, 1
      %p66 = scmp.eq.s32.totalorder %s16, 1
      %p67 = scmp.ne.s32.totalorder %s62, %s64
      %p68 = scmp.eq.s32.totalorder %s16, 0
      %p69 = por %p67, %p68
      %p70 = scmp.ne.s32.totalorder %s62, %s64
      %p71 = scmp.eq.s32.totalorder %s21, 1
      %p72 = por %p70, %p71
      %p73 = scmp.ne.s32.totalorder %s64, %s65
      %p74 = scmp.eq.s32.totalorder %s21, 0
      %p75 = por %p73, %p74
      %p76 = scmp.ne.s32.totalorder %s64, %s65
      %p77 = scmp.eq.s32.totalorder %s22, 1
      %p78 = por %p76, %p77
      %p80 = scmp.ne.s32.totalorder %s65, %s79
      %p81 = scmp.eq.s32.totalorder %s22, 0
      %p82 = por %p80, %p81
      %s84 = sadd.s32 %s83, 1
      %p87 = scmp.eq.s32.totalorder %s16, 1
      %p88 = scmp.ne.s32.totalorder %s83, %s85
      %p89 = scmp.eq.s32.totalorder %s16, 0
      %p90 = por %p88, %p89
      %p91 = scmp.ne.s32.totalorder %s83, %s85
      %p92 = scmp.eq.s32.totalorder %s21, 1
      %p93 = por %p91, %p92
      %p94 = scmp.ne.s32.totalorder %s85, %s86
      %p95 = scmp.eq.s32.totalorder %s21, 0
      %p96 = por %p94, %p95
      %p97 = scmp.ne.s32.totalorder %s85, %s86
      %p98 = scmp.eq.s32.totalorder %s22, 1
      %p99 = por %p97, %p98
      %p101 = scmp.ne.s32.totalorder %s86, %s100
      %p102 = scmp.eq.s32.totalorder %s22, 0
      %p103 = por %p101, %p102
      %s104 = ssub.s32 %s23, %s35
      %s105 = ssub.s32 %s24, %s31
      %s106 = sor.u32 %s104, %s105
      %p107 = scmp.eq.s32.totalorder %s106, 0
      %s109 = sadd.s32 %s108, 1
      %s110 = scalar_select %p107, %s108, %s109
      %p113 = pneg %p107
      %p114 = scmp.eq.s32.totalorder %s16, 1
      %p115 = por %p113, %p114
      %p116 = scmp.ne.s32.totalorder %s108, %s111
      %p117 = scmp.eq.s32.totalorder %s16, 0
      %p118 = por %p116, %p117
      %p119 = scmp.ne.s32.totalorder %s108, %s111
      %p120 = scmp.eq.s32.totalorder %s21, 1
      %p121 = por %p119, %p120
      %p122 = scmp.ne.s32.totalorder %s111, %s112
      %p123 = scmp.eq.s32.totalorder %s21, 0
      %p124 = por %p122, %p123
      %p125 = scmp.ne.s32.totalorder %s111, %s112
      %p126 = scmp.eq.s32.totalorder %s22, 1
      %p127 = por %p125, %p126
      %p129 = scmp.ne.s32.totalorder %s112, %s128
      %p130 = scmp.eq.s32.totalorder %s22, 0
      %p131 = por %p129, %p130
      %p132 = scmp.le.s32.totalorder 1, %s16
      %p133 = scmp.lt.s32.totalorder %s16, 3
      %p134 = pnand %p132, %p133
      %p135 = pneg %p134
      // Predicated region
      $region9: #{tpu_custom_call.1} parent=5 // pred_check
        _
      $region10: #{tpu_custom_call.1} parent=5 // pred_check_branch
        %137 = sbr.rel (%p134) target = $region12
      $region11: #{tpu_custom_call.1} parent=5 // pred_region
        %s138 = ssub.s32 %s16, 1
        // Predicated region
        $region13: #{tpu_custom_call.1} parent=11 // pred_check
          %p139 = pneg %p75
        $region14: #{tpu_custom_call.1} parent=11 // pred_check_branch
          %141 = sbr.rel (%p139) target = $region16
        $region15: #{tpu_custom_call.1} parent=11 // pred_region
          %143 = vsyncadd [#allocation6], 0
          %s144 = sshll.u32 %s1, 4
          %s145 = int_to_ptr.hbm [resolvable:$true] %s144
          %s146 = sshll.u32 [#allocation5], 4
          %s147 = int_to_ptr.vmem [resolvable:$true] %s146
          %152 = dma.hbm_to_vmem [thread:$0]  %s145, 2048, %s147, [#allocation6], 128, 128, 8
        $region16: #{tpu_custom_call.1} parent=11 // pred_fallthru
          _
        // Predicated region
        $region17: #{tpu_custom_call.1} parent=11 // pred_check
          %p153 = pneg %p96
        $region18: #{tpu_custom_call.1} parent=11 // pred_check_branch
          %155 = sbr.rel (%p153) target = $region20
        $region19: #{tpu_custom_call.1} parent=11 // pred_region
          _
        $region20: #{tpu_custom_call.1} parent=11 // pred_fallthru
          _
      $region12: #{tpu_custom_call.1} parent=5 // pred_fallthru
        _
      %p156 = scmp.lt.s32.totalorder %s16, 2
      // Predicated region
      $region21: #{tpu_custom_call.1} parent=5 // pred_check
        %p157 = pneg %p156
      $region22: #{tpu_custom_call.1} parent=5 // pred_check_branch
        %159 = sbr.rel (%p157) target = $region24
      $region23: #{tpu_custom_call.1} parent=5 // pred_region
        // Predicated region
        $region25: #{tpu_custom_call.1} parent=23 // pred_check
          %p160 = pneg %p48
        $region26: #{tpu_custom_call.1} parent=23 // pred_check_branch
          %162 = sbr.rel (%p160) target = $region28
        $region27: #{tpu_custom_call.1} parent=23 // pred_region
          %s163 = sand.u32 %s38, 1
          %s164 = scalar_lea.sflag [#allocation3], %s163
          %s165 = sand.u32 %s38, 1
          %s166 = smul.addr %s165, 8
          %s167 = scalar_lea.vmem [#allocation2], %s166
          %169 = vsyncadd %s164, 0
          %s170 = smul.addr %s23, 8
          %s171 = scalar_lea.hbm %s0, %s170
          %s173 = sshll.u32 %s171, 4
          %s174 = int_to_ptr.hbm [resolvable:$true] %s173
          %s175 = sshll.u32 %s167, 4
          %s176 = int_to_ptr.vmem [resolvable:$true] %s175
          %178 = dma.hbm_to_vmem [thread:$0]  %s174, 128, %s176, %s164
        $region28: #{tpu_custom_call.1} parent=23 // pred_fallthru
          _
      $region24: #{tpu_custom_call.1} parent=5 // pred_fallthru
        _
      %p179 = scmp.le.s32.totalorder 1, %s16
      %p180 = scmp.lt.s32.totalorder %s16, 3
      %p181 = pnand %p179, %p180
      %p182 = pneg %p181
      // Predicated region
      $region29: #{tpu_custom_call.1} parent=5 // pred_check
        _
      $region30: #{tpu_custom_call.1} parent=5 // pred_check_branch
        %184 = sbr.rel (%p181) target = $region32
      $region31: #{tpu_custom_call.1} parent=5 // pred_region
        %s185 = ssub.s32 %s16, 1
        %s186 = sand.u32 %s41, 1
        %s187 = scalar_lea.sflag [#allocation3], %s186
        %s188 = sand.u32 %s41, 1
        %s189 = smul.addr %s188, 8
        %s190 = scalar_lea.vmem [#allocation2], %s189
        // Predicated region
        $region33: #{tpu_custom_call.1} parent=31 // pred_check
          %p191 = pneg %p54
        $region34: #{tpu_custom_call.1} parent=31 // pred_check_branch
          %193 = sbr.rel (%p191) target = $region36
        $region35: #{tpu_custom_call.1} parent=31 // pred_region
          %195 = dma.done %s187, 128
        $region36: #{tpu_custom_call.1} parent=31 // pred_fallthru
          _
        // Predicated region
        $region37: #{tpu_custom_call.1} parent=31 // pred_check
          %p196 = pneg %p75
        $region38: #{tpu_custom_call.1} parent=31 // pred_check_branch
          %198 = sbr.rel (%p196) target = $region40
        $region39: #{tpu_custom_call.1} parent=31 // pred_region
          %200 = dma.done [#allocation6], 2048
        $region40: #{tpu_custom_call.1} parent=31 // pred_fallthru
          _
        %s201 = sand.u32 %s41, 1
        %s202 = scalar_lea.sflag [#allocation3], %s201
        %s203 = sand.u32 %s41, 1
        %s204 = smul.addr %s203, 8
        %s205 = scalar_lea.vmem [#allocation2], %s204
        %p206 = pneg %p54
        %p207 = pneg %p51
        %p208 = pneg %p75
        %p209 = pneg %p72
        %p210 = pneg %p96
        %p211 = pneg %p93
        %p212 = pneg %p124
        %p213 = pneg %p121
        %s214 = sand.u32 %s111, 1
        %s215 = scalar_lea.sflag [#allocation4], %s214
        %s216 = sand.u32 %s111, 1
        %s217 = smul.addr %s216, 8
        %s218 = scalar_lea.vmem [#allocation7], %s217
        %v219 = vld [vmem:[%s190] sm:$0xff]
        %v220 = vld [vmem:[#allocation5] sm:$0xff]
        %v221 = vld [vmem:[#allocation5 + $0x8] sm:$0xff]
        %v222 = vld [vmem:[#allocation5 + $0x10] sm:$0xff]
        %v223 = vld [vmem:[#allocation5 + $0x18] sm:$0xff]
        %v224 = vld [vmem:[#allocation5 + $0x20] sm:$0xff]
        %v225 = vld [vmem:[#allocation5 + $0x28] sm:$0xff]
        %v226 = vld [vmem:[#allocation5 + $0x30] sm:$0xff]
        %v227 = vld [vmem:[#allocation5 + $0x38] sm:$0xff]
        %v228 = vld [vmem:[#allocation5 + $0x40] sm:$0xff]
        %v229 = vld [vmem:[#allocation5 + $0x48] sm:$0xff]
        %v230 = vld [vmem:[#allocation5 + $0x50] sm:$0xff]
        %v231 = vld [vmem:[#allocation5 + $0x58] sm:$0xff]
        %v232 = vld [vmem:[#allocation5 + $0x60] sm:$0xff]
        %v233 = vld [vmem:[#allocation5 + $0x68] sm:$0xff]
        %v234 = vld [vmem:[#allocation5 + $0x70] sm:$0xff]
        %v235 = vld [vmem:[#allocation5 + $0x78] sm:$0xff]
        %v236 = vld [vmem:[%s2] sm:$0x1]
        %v238 = vperm.slane %v236, 0
        %240 = vmatpush.msra.mxu0 %v235
        %241 = vmatpush.msra.mxu0 %v234
        %242 = vmatpush.msra.mxu0 %v233
        %243 = vmatpush.msra.mxu0 %v232
        %244 = vmatpush.msra.mxu0 %v231
        %245 = vmatpush.msra.mxu0 %v230
        %246 = vmatpush.msra.mxu0 %v229
        %247 = vmatpush.msra.mxu0 %v228
        %248 = vmatpush.msra.mxu0 %v227
        %249 = vmatpush.msra.mxu0 %v226
        %250 = vmatpush.msra.mxu0 %v225
        %251 = vmatpush.msra.mxu0 %v224
        %252 = vmatpush.msra.mxu0 %v223
        %253 = vmatpush.msra.mxu0 %v222
        %254 = vmatpush.msra.mxu0 %v221
        %255 = vmatpush.msra.mxu0 %v220
        %256 = vmatmul.f32.gmra.mxu0 %v219
        %v257 = vpop.f32.mrf.mxu0
        %v258 = vadd.f32 %v238, %v257
        %259 = vdwg.mxu0
        %v260 = vmul.f32 %v258, %v258
        %v261 = vmul.f32 %v258, %v260
        %v262 = vmul.f32 %v261, 0.044715
        %v263 = vadd.f32 %v258, %v262
        %v264 = vmul.f32 %v263, 0.7978846
        %v265 = vtanh.pop %v264
        %v266 = vadd.f32 %v265, 1.0
        %v267 = vmul.f32 %v266, 0.5
        %v268 = vmul.f32 %v258, %v267
        %s269 = smul.u32 %s26, 128
        %s270 = sshra.s32 %s269, 7
        %s271 = sand.u32 %s269, 127
        %s272 = scalar_lea.vmem %s190, %s270 [#allocation2]
        %v273 = vld [vmem:[%s272] sm:$0xff]
        %v274 = vadd.f32 %v268, %v273
        %275 = vst [vmem:[%s218] sm:$0xff] %v274
        %s276 = sand.u32 %s111, 1
        %s277 = scalar_lea.sflag [#allocation4], %s276
        %s278 = sand.u32 %s111, 1
        %s279 = smul.addr %s278, 8
        %s280 = scalar_lea.vmem [#allocation7], %s279
        // Predicated region
        $region41: #{tpu_custom_call.1} parent=31 // pred_check
          %p281 = pneg %p121
        $region42: #{tpu_custom_call.1} parent=31 // pred_check_branch
          %283 = sbr.rel (%p281) target = $region44
        $region43: #{tpu_custom_call.1} parent=31 // pred_region
          %285 = vsyncadd %s277, 0
          %s286 = sadd.s32 %s26, %s25
          %s287 = smul.addr %s286, 8
          %s288 = scalar_lea.hbm %s3, %s287
          %s290 = sshll.u32 %s280, 4
          %s291 = int_to_ptr.vmem [resolvable:$true] %s290
          %s292 = sshll.u32 %s288, 4
          %s293 = int_to_ptr.hbm [resolvable:$true] %s292
          %295 = dma.vmem_to_hbm [thread:$0]  %s291, 128, %s293, %s277
        $region44: #{tpu_custom_call.1} parent=31 // pred_fallthru
          _
      $region32: #{tpu_custom_call.1} parent=5 // pred_fallthru
        _
      %p296 = scmp.le.s32.totalorder 2, %s16
      // Predicated region
      $region45: #{tpu_custom_call.1} parent=5 // pred_check
        %p297 = pneg %p296
      $region46: #{tpu_custom_call.1} parent=5 // pred_check_branch
        %299 = sbr.rel (%p297) target = $region48
      $region47: #{tpu_custom_call.1} parent=5 // pred_region
        %s300 = ssub.s32 %s16, 2
        // Predicated region
        $region49: #{tpu_custom_call.1} parent=47 // pred_check
          %p301 = pneg %p127
        $region50: #{tpu_custom_call.1} parent=47 // pred_check_branch
          %303 = sbr.rel (%p301) target = $region52
        $region51: #{tpu_custom_call.1} parent=47 // pred_region
          %s304 = sand.u32 %s112, 1
          %s305 = scalar_lea.sflag [#allocation4], %s304
          %s306 = sand.u32 %s112, 1
          %s307 = smul.addr %s306, 8
          %s308 = scalar_lea.vmem [#allocation7], %s307
          %310 = dma.done %s305, 128
        $region52: #{tpu_custom_call.1} parent=47 // pred_fallthru
          _
      $region48: #{tpu_custom_call.1} parent=5 // pred_fallthru
        _
    $region6: #{tpu_custom_call.1} parent=1 // loop_footer
      %s20 = sadd.s32 1, %s16
    $region7: #{tpu_custom_call.1} parent=1 // loop_footer_branch
      %15 = sbr.rel target = $region3
    $region8: #{tpu_custom_call.1} parent=1 // loop_exit
      _
    %311 = vsyncpa [#allocation3], 1
    %s312 = scalar_lea.sflag [#allocation3], 1
    %313 = vsyncpa %s312, 1
    %314 = vsyncpa [#allocation6], 1
    %315 = vsyncpa [#allocation4], 1
    %s316 = scalar_lea.sflag [#allocation4], 1
    %317 = vsyncpa %s316, 1

</llo_original>
